<compile_context>
chip_gen: v5e
topology: v5e:2x2
jax: 0.10.0
libtpu: 0.0.40
codegen_flags: <defaults>
</compile_context>

<pallas_src>
import jax
import jax.numpy as jnp
import jax.scipy.linalg
from jax.experimental import pallas as pl
from jax.experimental.pallas import tpu as pltpu


# --------------------------------------------------------------------------
# Kernel: h = z + relu(z @ Wz + b1) @ W2 + b2      (rows independent)
# --------------------------------------------------------------------------
def _z_proj_kernel(z_ref, wz_ref, b1_ref, w2_ref, b2_ref, h_ref):
    z = z_ref[...]                                            # (TILE_R, W)
    p1 = jnp.maximum(
        jnp.dot(z, wz_ref[...], preferred_element_type=jnp.float32)
        + b1_ref[...],
        0.0)
    h_ref[...] = (z
                  + jnp.dot(p1, w2_ref[...], preferred_element_type=jnp.float32)
                  + b2_ref[...])


# --------------------------------------------------------------------------
# Parameter init (PyTorch layout: y = x @ W + b, W stored (in, out))
# --------------------------------------------------------------------------
def init_params(key, emb_dim):
    D = emb_dim
    ks = jax.random.split(key, 8)
    s = 0.1
    # direction_basis_mlp: Linear(D,D) -> ReLU -> Linear(D,D)
    w1 = jax.random.normal(ks[0], (D, D), jnp.float32) * s
    b1 = jax.random.normal(ks[1], (1, D), jnp.float32) * s
    w2 = jax.random.normal(ks[2], (D, D), jnp.float32) * s
    b2 = jax.random.normal(ks[3], (1, D), jnp.float32) * s
    # z_projection: Linear(2D+1, D) -> ReLU -> Linear(D, D)
    pw_full = jax.random.normal(ks[4], (2 * D + 1, D), jnp.float32) * s
    pb1 = jax.random.normal(ks[5], (1, D), jnp.float32) * s
    pwz = pw_full[:D, :]                   # acts on z
    pwd = pw_full[D:2 * D, :]              # acts on direction
    w_ones = pw_full[2 * D:, :]            # acts on the ones column
    pb1_eff = pb1 + w_ones                 # fold ones-column into bias
    pw2 = jax.random.normal(ks[6], (D, D), jnp.float32) * s
    pb2 = jax.random.normal(ks[7], (1, D), jnp.float32) * s
    return (w1, b1, w2, b2, pwz, pwd, pb1_eff, pw2, pb2)


# --------------------------------------------------------------------------
# One-time per-model prep (hoisted out of the forward): choose lane packing
# and build block-diagonal weights once.
# --------------------------------------------------------------------------
def _default_lane_width():
    try:
        kind = jax.devices()[0].device_kind.lower()
    except Exception:
        return 128
    # v6e / v7x have 256-wide MXUs; 128 is optimal (and always safe) elsewhere.
    if "v6" in kind or "v7" in kind:
        return 256
    return 128


def prepare_params(params, lane_width=None):
    (w1, b1, w2, b2, pwz, pwd, pb1_eff, pw2, pb2) = params
    D = pwz.shape[0]
    if lane_width is None:
        lane_width = _default_lane_width()

    pack = 1
    if D < 128:
        if lane_width % D == 0:
            pack = lane_width // D
        elif 128 % D == 0:
            pack = 128 // D           # at least fill one vreg of lanes

    if pack > 1:
        wz_k = jax.scipy.linalg.block_diag(*([pwz] * pack))
        w2_k = jax.scipy.linalg.block_diag(*([pw2] * pack))
    else:
        wz_k, w2_k = pwz, pw2

    return dict(D=D, pack=pack,
                w1=w1, b1=b1, w2=w2, b2=b2,
                pwd=pwd, pb1_eff=pb1_eff, pb2=pb2,
                wz_k=wz_k, w2_k=w2_k)


def _choose_tile_rows(R):
    # Target ~512 rows/step (mem-bound roofline sweet spot), partial last
    # block instead of row padding, and >=2 steps when there is real work so
    # both v7x TensorCores participate.
    if R < 16:
        return max(R, 1)                      # single full-extent block
    steps = max(2, pl.cdiv(R, 512))
    tile = pl.cdiv(pl.cdiv(R, steps), 8) * 8  # multiple of 8 sublanes
    return max(8, min(tile, R))


# --------------------------------------------------------------------------
# Forward
# --------------------------------------------------------------------------
def direction_embedding_forward(z, direction_basis, alpha, prep):
    D, pack = prep["D"], prep["pack"]
    N = z.shape[0]
    z = z.astype(jnp.float32)
    db = direction_basis.reshape(1, D).astype(jnp.float32)

    # ---- direction-basis MLP + F.normalize: tiny (1, D) prologue, pure JAX ----
    h1 = jnp.maximum(db @ prep["w1"] + prep["b1"], 0.0)
    direction = h1 @ prep["w2"] + prep["b2"]                 # (1, D)
    nrm = jnp.sqrt(jnp.sum(direction * direction, axis=-1, keepdims=True))
    direction = direction / jnp.maximum(nrm, 1e-12)          # PyTorch eps

    # ---- fold direction / alpha into biases (once per call, not per tile) ----
    pb1_fold = prep["pb1_eff"] + direction @ prep["pwd"]     # (1, D)
    pb2_fold = prep["pb2"] + alpha * direction               # (1, D)

    # ---- lane-pack rows (metadata-only reshape) or run full-D blocks ----
    if pack > 1:
        rem = N % pack
        z_in = z if rem == 0 else jnp.pad(z, ((0, pack - rem), (0, 0)))
        R = z_in.shape[0] // pack
        z_in = z_in.reshape(R, pack * D)       # row-major -> metadata-only
        b1_in = jnp.tile(pb1_fold, (1, pack))  # (1, pack*D), tiny
        b2_in = jnp.tile(pb2_fold, (1, pack))
    else:
        z_in, R, b1_in, b2_in = z, N, pb1_fold, pb2_fold

    W = z_in.shape[1]
    tile_r = _choose_tile_rows(R)
    grid = (pl.cdiv(R, tile_r),)

    def run(use_buffered):
        def resident(shape):
            if use_buffered and hasattr(pl, "Buffered"):
                # Constant index_map => revisited every step; single buffer.
                return pl.BlockSpec(shape, lambda i: (0, 0),
                                    pipeline_mode=pl.Buffered(1))
            return pl.BlockSpec(shape, lambda i: (0, 0))

        return pl.pallas_call(
            _z_proj_kernel,
            out_shape=jax.ShapeDtypeStruct((R, W), jnp.float32),
            grid=grid,
            in_specs=[
                pl.BlockSpec((tile_r, W), lambda i: (i, 0)),   # z: streamed
                resident((W, W)),                              # Wz (block-diag)
                resident((1, W)),                              # pb1_fold
                resident((W, W)),                              # W2 (block-diag)
                resident((1, W)),                              # pb2_fold
            ],
            out_specs=pl.BlockSpec((tile_r, W), lambda i: (i, 0)),
            compiler_params=pltpu.CompilerParams(
                dimension_semantics=("parallel",)),
        )(z_in, prep["wz_k"], b1_in, prep["w2_k"], b2_in)

    try:
        h_pk = run(True)
    except Exception:
        # Fallback if this Pallas build rejects pipeline_mode=Buffered(1).
        h_pk = run(False)

    if pack > 1:
        h = h_pk.reshape(R * pack, D)
        if h.shape[0] != N:
            h = h[:N]
    else:
        h = h_pk
    return h, direction[0]


# --------------------------------------------------------------------------
# Pure-JAX reference mirroring the PyTorch forward (unfolded form)
# --------------------------------------------------------------------------
def _reference(z, direction_basis, alpha, params):
    (w1, b1, w2, b2, pwz, pwd, pb1_eff, pw2, pb2) = params
    d = jnp.maximum(direction_basis[None, :] @ w1 + b1, 0.0) @ w2 + b2
    d = d / jnp.maximum(jnp.sqrt(jnp.sum(d * d, axis=-1, keepdims=True)), 1e-12)
    p1 = jnp.maximum(z @ pwz + d @ pwd + pb1_eff, 0.0)
    proj = p1 @ pw2 + pb2
    h = z + alpha * d + proj
    return h, d[0]


if __name__ == "__main__":
    key = jax.random.PRNGKey(0)
    k_z, k_d, k_p = jax.random.split(key, 3)

    N, D = 8, 32          # batch of latents, emb_dim
    alpha = 0.5

    z = jax.random.normal(k_z, (N, D), jnp.float32)
    direction_basis = jax.random.normal(k_d, (D,), jnp.float32)
    params = init_params(k_p, D)
    prep = prepare_params(params)          # block-diag weights built once here

    h, direction = direction_embedding_forward(z, direction_basis, alpha, prep)
    h = jax.block_until_ready(h)
    direction = jax.block_until_ready(direction)

    h_ref, d_ref = _reference(z, direction_basis, alpha, params)
    assert h.shape == (N, D) and direction.shape == (D,)
    assert jnp.allclose(h, h_ref, atol=1e-4, rtol=1e-4)
    assert jnp.allclose(direction, d_ref, atol=1e-4, rtol=1e-4)

    print("KERNEL_OK")
</pallas_src>

<mosaic_0001>
module attributes {stable_mosaic.version = 11 : i64} {
  func.func @_z_proj_kernel(%arg0: i32, %arg1: memref<2x128xf32, #tpu.memory_space<vmem>>, %arg2: memref<128x128xf32, #tpu.memory_space<vmem>>, %arg3: memref<1x128xf32, #tpu.memory_space<vmem>>, %arg4: memref<128x128xf32, #tpu.memory_space<vmem>>, %arg5: memref<1x128xf32, #tpu.memory_space<vmem>>, %arg6: memref<2x128xf32, #tpu.memory_space<vmem>>) attributes {dimension_semantics = [#tpu.dimension_semantics<parallel>], iteration_bounds = array<i64: 1>, scalar_prefetch = 0 : i64, scratch_operands = 0 : i64, tpu.core_type = #tpu.core_type<tc>, window_params = [{transform_indices = @transform_0, window_bounds = array<i64: 2, 128>}, {pipeline_mode = #tpu.pipeline_mode<synchronous>, transform_indices = @transform_1, window_bounds = array<i64: 128, 128>}, {pipeline_mode = #tpu.pipeline_mode<synchronous>, transform_indices = @transform_2, window_bounds = array<i64: 1, 128>}, {pipeline_mode = #tpu.pipeline_mode<synchronous>, transform_indices = @transform_3, window_bounds = array<i64: 128, 128>}, {pipeline_mode = #tpu.pipeline_mode<synchronous>, transform_indices = @transform_4, window_bounds = array<i64: 1, 128>}, {transform_indices = @transform_5, window_bounds = array<i64: 2, 128>}]} {
    %c0 = arith.constant 0 : index
    %c0_0 = arith.constant 0 : index
    %0 = vector.load %arg1[%c0, %c0_0] : memref<2x128xf32, #tpu.memory_space<vmem>>, vector<2x128xf32>
    %c0_1 = arith.constant 0 : index
    %c0_2 = arith.constant 0 : index
    %1 = vector.load %arg2[%c0_1, %c0_2] : memref<128x128xf32, #tpu.memory_space<vmem>>, vector<128x128xf32>
    %cst = arith.constant dense<0.000000e+00> : vector<2x128xf32>
    %2 = tpu.matmul %0, %1, %cst {dimension_numbers = #tpu.dot_dimension_numbers<[1], [0], [0], [1], [0, 0, 1, 1], [], []>} : vector<2x128xf32>, vector<128x128xf32>, vector<2x128xf32> -> vector<2x128xf32>
    %c0_3 = arith.constant 0 : index
    %c0_4 = arith.constant 0 : index
    %3 = vector.load %arg3[%c0_3, %c0_4] : memref<1x128xf32, #tpu.memory_space<vmem>>, vector<1x128xf32>
    %4 = vector.broadcast %3 : vector<1x128xf32> to vector<2x128xf32>
    %5 = arith.addf %2, %4 : vector<2x128xf32>
    %cst_5 = arith.constant 0.000000e+00 : f32
    %6 = vector.broadcast %cst_5 : f32 to vector<2x128xf32>
    %7 = arith.maximumf %5, %6 : vector<2x128xf32>
    %c0_6 = arith.constant 0 : index
    %c0_7 = arith.constant 0 : index
    %8 = vector.load %arg4[%c0_6, %c0_7] : memref<128x128xf32, #tpu.memory_space<vmem>>, vector<128x128xf32>
    %cst_8 = arith.constant dense<0.000000e+00> : vector<2x128xf32>
    %9 = tpu.matmul %7, %8, %cst_8 {dimension_numbers = #tpu.dot_dimension_numbers<[1], [0], [0], [1], [0, 0, 1, 1], [], []>} : vector<2x128xf32>, vector<128x128xf32>, vector<2x128xf32> -> vector<2x128xf32>
    %10 = arith.addf %0, %9 : vector<2x128xf32>
    %c0_9 = arith.constant 0 : index
    %c0_10 = arith.constant 0 : index
    %11 = vector.load %arg5[%c0_9, %c0_10] : memref<1x128xf32, #tpu.memory_space<vmem>>, vector<1x128xf32>
    %12 = vector.broadcast %11 : vector<1x128xf32> to vector<2x128xf32>
    %13 = arith.addf %10, %12 : vector<2x128xf32>
    %c0_11 = arith.constant 0 : index
    %c0_12 = arith.constant 0 : index
    %14 = vector.load %arg6[%c0_11, %c0_12] : memref<2x128xf32, #tpu.memory_space<vmem>>, vector<2x128xf32>
    tpu.vector_store %arg6[%c0_11, %c0_12], %13 {strides = array<i32>} : memref<2x128xf32, #tpu.memory_space<vmem>>, vector<2x128xf32>,
    return
  }
  func.func @transform_0(%arg0: i32) -> (i32, i32) {
    %c0_i32 = arith.constant 0 : i32
    %c0_i32_0 = arith.constant 0 : i32
    return %arg0, %c0_i32 : i32, i32
  }
  func.func @transform_1(%arg0: i32) -> (i32, i32) {
    %c0_i32 = arith.constant 0 : i32
    %c0_i32_0 = arith.constant 0 : i32
    %c0_i32_1 = arith.constant 0 : i32
    return %c0_i32, %c0_i32_0 : i32, i32
  }
  func.func @transform_2(%arg0: i32) -> (i32, i32) {
    %c0_i32 = arith.constant 0 : i32
    %c0_i32_0 = arith.constant 0 : i32
    %c0_i32_1 = arith.constant 0 : i32
    return %c0_i32, %c0_i32_0 : i32, i32
  }
  func.func @transform_3(%arg0: i32) -> (i32, i32) {
    %c0_i32 = arith.constant 0 : i32
    %c0_i32_0 = arith.constant 0 : i32
    %c0_i32_1 = arith.constant 0 : i32
    return %c0_i32, %c0_i32_0 : i32, i32
  }
  func.func @transform_4(%arg0: i32) -> (i32, i32) {
    %c0_i32 = arith.constant 0 : i32
    %c0_i32_0 = arith.constant 0 : i32
    %c0_i32_1 = arith.constant 0 : i32
    return %c0_i32, %c0_i32_0 : i32, i32
  }
  func.func @transform_5(%arg0: i32) -> (i32, i32) {
    %c0_i32 = arith.constant 0 : i32
    %c0_i32_0 = arith.constant 0 : i32
    return %arg0, %c0_i32 : i32, i32
  }
}

module attributes {stable_mosaic.version = 11 : i64} {
  func.func @_z_proj_kernel(%arg0: i32, %arg1: memref<2x128xf32, #tpu.memory_space<vmem>>, %arg2: memref<128x128xf32, #tpu.memory_space<vmem>>, %arg3: memref<1x128xf32, #tpu.memory_space<vmem>>, %arg4: memref<128x128xf32, #tpu.memory_space<vmem>>, %arg5: memref<1x128xf32, #tpu.memory_space<vmem>>, %arg6: memref<2x128xf32, #tpu.memory_space<vmem>>) attributes {dimension_semantics = [#tpu.dimension_semantics<parallel>], iteration_bounds = array<i64: 1>, scalar_prefetch = 0 : i64, scratch_operands = 0 : i64, tpu.core_type = #tpu.core_type<tc>, window_params = [{transform_indices = @transform_0, window_bounds = array<i64: 2, 128>}, {pipeline_mode = #tpu.pipeline_mode<synchronous>, transform_indices = @transform_1, window_bounds = array<i64: 128, 128>}, {pipeline_mode = #tpu.pipeline_mode<synchronous>, transform_indices = @transform_2, window_bounds = array<i64: 1, 128>}, {pipeline_mode = #tpu.pipeline_mode<synchronous>, transform_indices = @transform_3, window_bounds = array<i64: 128, 128>}, {pipeline_mode = #tpu.pipeline_mode<synchronous>, transform_indices = @transform_4, window_bounds = array<i64: 1, 128>}, {transform_indices = @transform_5, window_bounds = array<i64: 2, 128>}]} {
    %c0 = arith.constant 0 : index
    %c0_0 = arith.constant 0 : index
    %0 = vector.load %arg1[%c0, %c0_0] : memref<2x128xf32, #tpu.memory_space<vmem>>, vector<2x128xf32>
    %c0_1 = arith.constant 0 : index
    %c0_2 = arith.constant 0 : index
    %1 = vector.load %arg2[%c0_1, %c0_2] : memref<128x128xf32, #tpu.memory_space<vmem>>, vector<128x128xf32>
    %cst = arith.constant dense<0.000000e+00> : vector<2x128xf32>
    %2 = tpu.matmul %0, %1, %cst {dimension_numbers = #tpu.dot_dimension_numbers<[1], [0], [0], [1], [0, 0, 1, 1], [], []>} : vector<2x128xf32>, vector<128x128xf32>, vector<2x128xf32> -> vector<2x128xf32>
    %c0_3 = arith.constant 0 : index
    %c0_4 = arith.constant 0 : index
    %3 = vector.load %arg3[%c0_3, %c0_4] : memref<1x128xf32, #tpu.memory_space<vmem>>, vector<1x128xf32>
    %4 = vector.broadcast %3 : vector<1x128xf32> to vector<2x128xf32>
    %5 = arith.addf %2, %4 : vector<2x128xf32>
    %cst_5 = arith.constant 0.000000e+00 : f32
    %6 = vector.broadcast %cst_5 : f32 to vector<2x128xf32>
    %7 = arith.maximumf %5, %6 : vector<2x128xf32>
    %c0_6 = arith.constant 0 : index
    %c0_7 = arith.constant 0 : index
    %8 = vector.load %arg4[%c0_6, %c0_7] : memref<128x128xf32, #tpu.memory_space<vmem>>, vector<128x128xf32>
    %cst_8 = arith.constant dense<0.000000e+00> : vector<2x128xf32>
    %9 = tpu.matmul %7, %8, %cst_8 {dimension_numbers = #tpu.dot_dimension_numbers<[1], [0], [0], [1], [0, 0, 1, 1], [], []>} : vector<2x128xf32>, vector<128x128xf32>, vector<2x128xf32> -> vector<2x128xf32>
    %10 = arith.addf %0, %9 : vector<2x128xf32>
    %c0_9 = arith.constant 0 : index
    %c0_10 = arith.constant 0 : index
    %11 = vector.load %arg5[%c0_9, %c0_10] : memref<1x128xf32, #tpu.memory_space<vmem>>, vector<1x128xf32>
    %12 = vector.broadcast %11 : vector<1x128xf32> to vector<2x128xf32>
    %13 = arith.addf %10, %12 : vector<2x128xf32>
    %c0_11 = arith.constant 0 : index
    %c0_12 = arith.constant 0 : index
    %14 = vector.load %arg6[%c0_11, %c0_12] : memref<2x128xf32, #tpu.memory_space<vmem>>, vector<2x128xf32>
    tpu.vector_store %arg6[%c0_11, %c0_12], %13 {strides = array<i32>} : memref<2x128xf32, #tpu.memory_space<vmem>>, vector<2x128xf32>,
    return
  }
  func.func @transform_0(%arg0: i32) -> (i32, i32) {
    %c0_i32 = arith.constant 0 : i32
    %c0_i32_0 = arith.constant 0 : i32
    return %arg0, %c0_i32 : i32, i32
  }
  func.func @transform_1(%arg0: i32) -> (i32, i32) {
    %c0_i32 = arith.constant 0 : i32
    %c0_i32_0 = arith.constant 0 : i32
    %c0_i32_1 = arith.constant 0 : i32
    return %c0_i32, %c0_i32_0 : i32, i32
  }
  func.func @transform_2(%arg0: i32) -> (i32, i32) {
    %c0_i32 = arith.constant 0 : i32
    %c0_i32_0 = arith.constant 0 : i32
    %c0_i32_1 = arith.constant 0 : i32
    return %c0_i32, %c0_i32_0 : i32, i32
  }
  func.func @transform_3(%arg0: i32) -> (i32, i32) {
    %c0_i32 = arith.constant 0 : i32
    %c0_i32_0 = arith.constant 0 : i32
    %c0_i32_1 = arith.constant 0 : i32
    return %c0_i32, %c0_i32_0 : i32, i32
  }
  func.func @transform_4(%arg0: i32) -> (i32, i32) {
    %c0_i32 = arith.constant 0 : i32
    %c0_i32_0 = arith.constant 0 : i32
    %c0_i32_1 = arith.constant 0 : i32
    return %c0_i32, %c0_i32_0 : i32, i32
  }
  func.func @transform_5(%arg0: i32) -> (i32, i32) {
    %c0_i32 = arith.constant 0 : i32
    %c0_i32_0 = arith.constant 0 : i32
    return %arg0, %c0_i32 : i32, i32
  }
}

</mosaic_0001>

<llo_original>
// kernel: tpu_custom_call.1
$region0: #{tpu_custom_call.1}
  #allocation0 [shape = 'u32[]', space=smem, size = 0x4, offset = 0x4, fixed_abs, tag = 'smem constant byte address 0x4 - core index']
  #allocation1 [shape = 'u32[72,128]{1,0:T(1,128)}', space=vmem, size = 0x9000, scoped, tag = 'internal scratch']
  %s0 = inlined_call_operand.hbm [shape: f32[2,128], index: 0, kind: input, shape index: {}]
  %s1 = inlined_call_operand.hbm [shape: f32[128,128], index: 1, kind: input, shape index: {}]
  %s2 = inlined_call_operand.vmem [shape: f32[1,128], index: 2, kind: input, shape index: {}]
  %s3 = inlined_call_operand.hbm [shape: f32[128,128], index: 3, kind: input, shape index: {}]
  %s4 = inlined_call_operand.vmem [shape: f32[1,128], index: 4, kind: input, shape index: {}]
  %s5 = inlined_call_operand.hbm [shape: f32[2,128], index: 5, kind: output, shape index: {}]
  %s6 = sld [smem:[#allocation0]]
  $region42: #{tpu_custom_call.1} parent=0
    _
  %s8 = ssub.s32 1, %s6
  %s9 = scalar_select 0, %s8, %s6
  $region1: #{tpu_custom_call.1} parent=0
    #allocation2 [shape = 'u8[1024]{0}', space=vmem, size = 0x400, scoped, tag = 'input window, operand 0, single buffered']
    #allocation3 [shape = 's32[1]{0}', space=sflag, size = 0x4, scoped, tag = 'scoped memory for tpu_custom_call.1']
    #allocation4 [shape = 's32[1]{0}', space=sflag, size = 0x4, scoped, tag = 'scoped memory for tpu_custom_call.1']
    #allocation5 [shape = 'u8[65536]{0}', space=vmem, size = 0x10000, scoped, tag = 'input window, operand 1, single buffered']
    #allocation6 [shape = 's32[1]{0}', space=sflag, size = 0x4, scoped, tag = 'scoped memory for tpu_custom_call.1']
    #allocation7 [shape = 'u8[65536]{0}', space=vmem, size = 0x10000, scoped, tag = 'input window, operand 3, single buffered']
    #allocation8 [shape = 'u8[1024]{0}', space=vmem, size = 0x400, scoped, tag = 'output window, operand 0, single buffered']
    %10 = vsyncpa [#allocation3], 0
    %11 = vsyncpa [#allocation6], 0
    %12 = vsyncpa [#allocation4], 0
    // Predicated region
    $region2: #{tpu_custom_call.1} parent=1 // pred_check
      _
    $region3: #{tpu_custom_call.1} parent=1 // pred_check_branch
      %14 = sbr.rel (0) target = $region5
    $region4: #{tpu_custom_call.1} parent=1 // pred_region
      %16 = vsyncadd [#allocation3], 0
      %s18 = sshll.u32 %s0, 4
      %s19 = int_to_ptr.hbm [resolvable:$true] %s18
      %s20 = sshll.u32 [#allocation2], 4
      %s21 = int_to_ptr.vmem [resolvable:$true] %s20
      %23 = dma.hbm_to_vmem [thread:$0]  %s19, 32, %s21, [#allocation3]
    $region5: #{tpu_custom_call.1} parent=1 // pred_fallthru
      _
    // Predicated region
    $region6: #{tpu_custom_call.1} parent=1 // pred_check
      _
    $region7: #{tpu_custom_call.1} parent=1 // pred_check_branch
      %25 = sbr.rel (0) target = $region9
    $region8: #{tpu_custom_call.1} parent=1 // pred_region
      %27 = vsyncadd [#allocation6], 0
      %s28 = sshll.u32 %s1, 4
      %s29 = int_to_ptr.hbm [resolvable:$true] %s28
      %s30 = sshll.u32 [#allocation5], 4
      %s31 = int_to_ptr.vmem [resolvable:$true] %s30
      %36 = dma.hbm_to_vmem [thread:$0]  %s29, 2048, %s31, [#allocation6], 128, 128, 8
    $region9: #{tpu_custom_call.1} parent=1 // pred_fallthru
      _
    // Predicated region
    $region10: #{tpu_custom_call.1} parent=1 // pred_check
      _
    $region11: #{tpu_custom_call.1} parent=1 // pred_check_branch
      %38 = sbr.rel (0) target = $region13
    $region12: #{tpu_custom_call.1} parent=1 // pred_region
      _
    $region13: #{tpu_custom_call.1} parent=1 // pred_fallthru
      _
    // Predicated region
    $region14: #{tpu_custom_call.1} parent=1 // pred_check
      _
    $region15: #{tpu_custom_call.1} parent=1 // pred_check_branch
      %40 = sbr.rel (0) target = $region17
    $region16: #{tpu_custom_call.1} parent=1 // pred_region
      %42 = vsyncadd [#allocation6], 0
      %s43 = sshll.u32 %s3, 4
      %s44 = int_to_ptr.hbm [resolvable:$true] %s43
      %s45 = sshll.u32 [#allocation7], 4
      %s46 = int_to_ptr.vmem [resolvable:$true] %s45
      %51 = dma.hbm_to_vmem [thread:$0]  %s44, 2048, %s46, [#allocation6], 128, 128, 8
    $region17: #{tpu_custom_call.1} parent=1 // pred_fallthru
      _
    // Predicated region
    $region18: #{tpu_custom_call.1} parent=1 // pred_check
      _
    $region19: #{tpu_custom_call.1} parent=1 // pred_check_branch
      %53 = sbr.rel (0) target = $region21
    $region20: #{tpu_custom_call.1} parent=1 // pred_region
      _
    $region21: #{tpu_custom_call.1} parent=1 // pred_fallthru
      _
    // Predicated region
    $region22: #{tpu_custom_call.1} parent=1 // pred_check
      _
    $region23: #{tpu_custom_call.1} parent=1 // pred_check_branch
      %55 = sbr.rel (0) target = $region25
    $region24: #{tpu_custom_call.1} parent=1 // pred_region
      %57 = dma.done [#allocation3], 32
    $region25: #{tpu_custom_call.1} parent=1 // pred_fallthru
      _
    // Predicated region
    $region26: #{tpu_custom_call.1} parent=1 // pred_check
      _
    $region27: #{tpu_custom_call.1} parent=1 // pred_check_branch
      %59 = sbr.rel (0) target = $region29
    $region28: #{tpu_custom_call.1} parent=1 // pred_region
      %61 = dma.done [#allocation6], 2048
    $region29: #{tpu_custom_call.1} parent=1 // pred_fallthru
      _
    // Predicated region
    $region30: #{tpu_custom_call.1} parent=1 // pred_check
      _
    $region31: #{tpu_custom_call.1} parent=1 // pred_check_branch
      %63 = sbr.rel (0) target = $region33
    $region32: #{tpu_custom_call.1} parent=1 // pred_region
      %65 = dma.done [#allocation6], 2048
    $region33: #{tpu_custom_call.1} parent=1 // pred_fallthru
      _
    %v66 = vld [vmem:[#allocation2] sm:$0x3]
    %v67 = vld [vmem:[#allocation5] sm:$0xff]
    %v68 = vld [vmem:[#allocation5 + $0x8] sm:$0xff]
    %v69 = vld [vmem:[#allocation5 + $0x10] sm:$0xff]
    %v70 = vld [vmem:[#allocation5 + $0x18] sm:$0xff]
    %v71 = vld [vmem:[#allocation5 + $0x20] sm:$0xff]
    %v72 = vld [vmem:[#allocation5 + $0x28] sm:$0xff]
    %v73 = vld [vmem:[#allocation5 + $0x30] sm:$0xff]
    %v74 = vld [vmem:[#allocation5 + $0x38] sm:$0xff]
    %v75 = vld [vmem:[#allocation5 + $0x40] sm:$0xff]
    %v76 = vld [vmem:[#allocation5 + $0x48] sm:$0xff]
    %v77 = vld [vmem:[#allocation5 + $0x50] sm:$0xff]
    %v78 = vld [vmem:[#allocation5 + $0x58] sm:$0xff]
    %v79 = vld [vmem:[#allocation5 + $0x60] sm:$0xff]
    %v80 = vld [vmem:[#allocation5 + $0x68] sm:$0xff]
    %v81 = vld [vmem:[#allocation5 + $0x70] sm:$0xff]
    %v82 = vld [vmem:[#allocation5 + $0x78] sm:$0xff]
    %v83 = vld [vmem:[%s2] sm:$0x1]
    %v85 = vperm.slane %v83, 0
    %87 = vmatpush.msra.mxu0 %v82
    %88 = vmatpush.msra.mxu0 %v81
    %89 = vmatpush.msra.mxu0 %v80
    %90 = vmatpush.msra.mxu0 %v79
    %91 = vmatpush.msra.mxu0 %v78
    %92 = vmatpush.msra.mxu0 %v77
    %93 = vmatpush.msra.mxu0 %v76
    %94 = vmatpush.msra.mxu0 %v75
    %95 = vmatpush.msra.mxu0 %v74
    %96 = vmatpush.msra.mxu0 %v73
    %97 = vmatpush.msra.mxu0 %v72
    %98 = vmatpush.msra.mxu0 %v71
    %99 = vmatpush.msra.mxu0 %v70
    %100 = vmatpush.msra.mxu0 %v69
    %101 = vmatpush.msra.mxu0 %v68
    %102 = vmatpush.msra.mxu0 %v67
    %103 = vmatmul.f32.gmra.mxu0 %v66
    %v104 = vpop.f32.mrf.mxu0
    %v105 = vadd.f32 %v85, %v104
    %106 = vdwg.mxu0
    %v107 = vmax.f32 %v105, 0.0
    %v108 = vld [vmem:[#allocation7] sm:$0xff]
    %v109 = vld [vmem:[#allocation7 + $0x8] sm:$0xff]
    %v110 = vld [vmem:[#allocation7 + $0x10] sm:$0xff]
    %v111 = vld [vmem:[#allocation7 + $0x18] sm:$0xff]
    %v112 = vld [vmem:[#allocation7 + $0x20] sm:$0xff]
    %v113 = vld [vmem:[#allocation7 + $0x28] sm:$0xff]
    %v114 = vld [vmem:[#allocation7 + $0x30] sm:$0xff]
    %v115 = vld [vmem:[#allocation7 + $0x38] sm:$0xff]
    %v116 = vld [vmem:[#allocation7 + $0x40] sm:$0xff]
    %v117 = vld [vmem:[#allocation7 + $0x48] sm:$0xff]
    %v118 = vld [vmem:[#allocation7 + $0x50] sm:$0xff]
    %v119 = vld [vmem:[#allocation7 + $0x58] sm:$0xff]
    %v120 = vld [vmem:[#allocation7 + $0x60] sm:$0xff]
    %v121 = vld [vmem:[#allocation7 + $0x68] sm:$0xff]
    %v122 = vld [vmem:[#allocation7 + $0x70] sm:$0xff]
    %v123 = vld [vmem:[#allocation7 + $0x78] sm:$0xff]
    %124 = vmatpush.msra.mxu0 %v123
    %125 = vmatpush.msra.mxu0 %v122
    %126 = vmatpush.msra.mxu0 %v121
    %127 = vmatpush.msra.mxu0 %v120
    %128 = vmatpush.msra.mxu0 %v119
    %129 = vmatpush.msra.mxu0 %v118
    %130 = vmatpush.msra.mxu0 %v117
    %131 = vmatpush.msra.mxu0 %v116
    %132 = vmatpush.msra.mxu0 %v115
    %133 = vmatpush.msra.mxu0 %v114
    %134 = vmatpush.msra.mxu0 %v113
    %135 = vmatpush.msra.mxu0 %v112
    %136 = vmatpush.msra.mxu0 %v111
    %137 = vmatpush.msra.mxu0 %v110
    %138 = vmatpush.msra.mxu0 %v109
    %139 = vmatpush.msra.mxu0 %v108
    %140 = vmatmul.f32.gmra.mxu0 %v107
    %v141 = vpop.f32.mrf.mxu0
    %v142 = vadd.f32 0.0, %v141
    %143 = vdwg.mxu0
    %v144 = vadd.f32 %v66, %v142
    %v145 = vld [vmem:[%s4] sm:$0x1]
    %v147 = vperm.slane %v145, 0
    %v149 = vadd.f32 %v144, %v147
    %150 = vst [vmem:[#allocation8] sm:$0x3] %v149
    // Predicated region
    $region34: #{tpu_custom_call.1} parent=1 // pred_check
      _
    $region35: #{tpu_custom_call.1} parent=1 // pred_check_branch
      %152 = sbr.rel (0) target = $region37
    $region36: #{tpu_custom_call.1} parent=1 // pred_region
      %154 = vsyncadd [#allocation4], 0
      %s156 = sshll.u32 [#allocation8], 4
      %s157 = int_to_ptr.vmem [resolvable:$true] %s156
      %s158 = sshll.u32 %s5, 4
      %s159 = int_to_ptr.hbm [resolvable:$true] %s158
      %161 = dma.vmem_to_hbm [thread:$0]  %s157, 32, %s159, [#allocation4]
    $region37: #{tpu_custom_call.1} parent=1 // pred_fallthru
      _
    // Predicated region
    $region38: #{tpu_custom_call.1} parent=1 // pred_check
      _
    $region39: #{tpu_custom_call.1} parent=1 // pred_check_branch
      %163 = sbr.rel (0) target = $region41
    $region40: #{tpu_custom_call.1} parent=1 // pred_region
      %165 = dma.done [#allocation4], 32
    $region41: #{tpu_custom_call.1} parent=1 // pred_fallthru
      _
    %166 = vsyncpa [#allocation3], 1
    %167 = vsyncpa [#allocation6], 1
    %168 = vsyncpa [#allocation4], 1

// kernel: tpu_custom_call.1
$region0: #{tpu_custom_call.1}
  #allocation0 [shape = 'u32[]', space=smem, size = 0x4, offset = 0x4, fixed_abs, tag = 'smem constant byte address 0x4 - core index']
  #allocation1 [shape = 'u32[72,128]{1,0:T(1,128)}', space=vmem, size = 0x9000, scoped, tag = 'internal scratch']
  %s0 = inlined_call_operand.hbm [shape: f32[2,128], index: 0, kind: input, shape index: {}]
  %s1 = inlined_call_operand.hbm [shape: f32[128,128], index: 1, kind: input, shape index: {}]
  %s2 = inlined_call_operand.vmem [shape: f32[1,128], index: 2, kind: input, shape index: {}]
  %s3 = inlined_call_operand.hbm [shape: f32[128,128], index: 3, kind: input, shape index: {}]
  %s4 = inlined_call_operand.vmem [shape: f32[1,128], index: 4, kind: input, shape index: {}]
  %s5 = inlined_call_operand.hbm [shape: f32[2,128], index: 5, kind: output, shape index: {}]
  %s6 = sld [smem:[#allocation0]]
  $region42: #{tpu_custom_call.1} parent=0
    _
  %s8 = ssub.s32 1, %s6
  %s9 = scalar_select 0, %s8, %s6
  $region1: #{tpu_custom_call.1} parent=0
    #allocation2 [shape = 'u8[1024]{0}', space=vmem, size = 0x400, scoped, tag = 'input window, operand 0, single buffered']
    #allocation3 [shape = 's32[1]{0}', space=sflag, size = 0x4, scoped, tag = 'scoped memory for tpu_custom_call.1']
    #allocation4 [shape = 's32[1]{0}', space=sflag, size = 0x4, scoped, tag = 'scoped memory for tpu_custom_call.1']
    #allocation5 [shape = 'u8[65536]{0}', space=vmem, size = 0x10000, scoped, tag = 'input window, operand 1, single buffered']
    #allocation6 [shape = 's32[1]{0}', space=sflag, size = 0x4, scoped, tag = 'scoped memory for tpu_custom_call.1']
    #allocation7 [shape = 'u8[65536]{0}', space=vmem, size = 0x10000, scoped, tag = 'input window, operand 3, single buffered']
    #allocation8 [shape = 'u8[1024]{0}', space=vmem, size = 0x400, scoped, tag = 'output window, operand 0, single buffered']
    %10 = vsyncpa [#allocation3], 0
    %11 = vsyncpa [#allocation6], 0
    %12 = vsyncpa [#allocation4], 0
    // Predicated region
    $region2: #{tpu_custom_call.1} parent=1 // pred_check
      _
    $region3: #{tpu_custom_call.1} parent=1 // pred_check_branch
      %14 = sbr.rel (0) target = $region5
    $region4: #{tpu_custom_call.1} parent=1 // pred_region
      %16 = vsyncadd [#allocation3], 0
      %s18 = sshll.u32 %s0, 4
      %s19 = int_to_ptr.hbm [resolvable:$true] %s18
      %s20 = sshll.u32 [#allocation2], 4
      %s21 = int_to_ptr.vmem [resolvable:$true] %s20
      %23 = dma.hbm_to_vmem [thread:$0]  %s19, 32, %s21, [#allocation3]
    $region5: #{tpu_custom_call.1} parent=1 // pred_fallthru
      _
    // Predicated region
    $region6: #{tpu_custom_call.1} parent=1 // pred_check
      _
    $region7: #{tpu_custom_call.1} parent=1 // pred_check_branch
      %25 = sbr.rel (0) target = $region9
    $region8: #{tpu_custom_call.1} parent=1 // pred_region
      %27 = vsyncadd [#allocation6], 0
      %s28 = sshll.u32 %s1, 4
      %s29 = int_to_ptr.hbm [resolvable:$true] %s28
      %s30 = sshll.u32 [#allocation5], 4
      %s31 = int_to_ptr.vmem [resolvable:$true] %s30
      %36 = dma.hbm_to_vmem [thread:$0]  %s29, 2048, %s31, [#allocation6], 128, 128, 8
    $region9: #{tpu_custom_call.1} parent=1 // pred_fallthru
      _
    // Predicated region
    $region10: #{tpu_custom_call.1} parent=1 // pred_check
      _
    $region11: #{tpu_custom_call.1} parent=1 // pred_check_branch
      %38 = sbr.rel (0) target = $region13
    $region12: #{tpu_custom_call.1} parent=1 // pred_region
      _
    $region13: #{tpu_custom_call.1} parent=1 // pred_fallthru
      _
    // Predicated region
    $region14: #{tpu_custom_call.1} parent=1 // pred_check
      _
    $region15: #{tpu_custom_call.1} parent=1 // pred_check_branch
      %40 = sbr.rel (0) target = $region17
    $region16: #{tpu_custom_call.1} parent=1 // pred_region
      %42 = vsyncadd [#allocation6], 0
      %s43 = sshll.u32 %s3, 4
      %s44 = int_to_ptr.hbm [resolvable:$true] %s43
      %s45 = sshll.u32 [#allocation7], 4
      %s46 = int_to_ptr.vmem [resolvable:$true] %s45
      %51 = dma.hbm_to_vmem [thread:$0]  %s44, 2048, %s46, [#allocation6], 128, 128, 8
    $region17: #{tpu_custom_call.1} parent=1 // pred_fallthru
      _
    // Predicated region
    $region18: #{tpu_custom_call.1} parent=1 // pred_check
      _
    $region19: #{tpu_custom_call.1} parent=1 // pred_check_branch
      %53 = sbr.rel (0) target = $region21
    $region20: #{tpu_custom_call.1} parent=1 // pred_region
      _
    $region21: #{tpu_custom_call.1} parent=1 // pred_fallthru
      _
    // Predicated region
    $region22: #{tpu_custom_call.1} parent=1 // pred_check
      _
    $region23: #{tpu_custom_call.1} parent=1 // pred_check_branch
      %55 = sbr.rel (0) target = $region25
    $region24: #{tpu_custom_call.1} parent=1 // pred_region
      %57 = dma.done [#allocation3], 32
    $region25: #{tpu_custom_call.1} parent=1 // pred_fallthru
      _
    // Predicated region
    $region26: #{tpu_custom_call.1} parent=1 // pred_check
      _
    $region27: #{tpu_custom_call.1} parent=1 // pred_check_branch
      %59 = sbr.rel (0) target = $region29
    $region28: #{tpu_custom_call.1} parent=1 // pred_region
      %61 = dma.done [#allocation6], 2048
    $region29: #{tpu_custom_call.1} parent=1 // pred_fallthru
      _
    // Predicated region
    $region30: #{tpu_custom_call.1} parent=1 // pred_check
      _
    $region31: #{tpu_custom_call.1} parent=1 // pred_check_branch
      %63 = sbr.rel (0) target = $region33
    $region32: #{tpu_custom_call.1} parent=1 // pred_region
      %65 = dma.done [#allocation6], 2048
    $region33: #{tpu_custom_call.1} parent=1 // pred_fallthru
      _
    %v66 = vld [vmem:[#allocation2] sm:$0x3]
    %v67 = vld [vmem:[#allocation5] sm:$0xff]
    %v68 = vld [vmem:[#allocation5 + $0x8] sm:$0xff]
    %v69 = vld [vmem:[#allocation5 + $0x10] sm:$0xff]
    %v70 = vld [vmem:[#allocation5 + $0x18] sm:$0xff]
    %v71 = vld [vmem:[#allocation5 + $0x20] sm:$0xff]
    %v72 = vld [vmem:[#allocation5 + $0x28] sm:$0xff]
    %v73 = vld [vmem:[#allocation5 + $0x30] sm:$0xff]
    %v74 = vld [vmem:[#allocation5 + $0x38] sm:$0xff]
    %v75 = vld [vmem:[#allocation5 + $0x40] sm:$0xff]
    %v76 = vld [vmem:[#allocation5 + $0x48] sm:$0xff]
    %v77 = vld [vmem:[#allocation5 + $0x50] sm:$0xff]
    %v78 = vld [vmem:[#allocation5 + $0x58] sm:$0xff]
    %v79 = vld [vmem:[#allocation5 + $0x60] sm:$0xff]
    %v80 = vld [vmem:[#allocation5 + $0x68] sm:$0xff]
    %v81 = vld [vmem:[#allocation5 + $0x70] sm:$0xff]
    %v82 = vld [vmem:[#allocation5 + $0x78] sm:$0xff]
    %v83 = vld [vmem:[%s2] sm:$0x1]
    %v85 = vperm.slane %v83, 0
    %87 = vmatpush.msra.mxu0 %v82
    %88 = vmatpush.msra.mxu0 %v81
    %89 = vmatpush.msra.mxu0 %v80
    %90 = vmatpush.msra.mxu0 %v79
    %91 = vmatpush.msra.mxu0 %v78
    %92 = vmatpush.msra.mxu0 %v77
    %93 = vmatpush.msra.mxu0 %v76
    %94 = vmatpush.msra.mxu0 %v75
    %95 = vmatpush.msra.mxu0 %v74
    %96 = vmatpush.msra.mxu0 %v73
    %97 = vmatpush.msra.mxu0 %v72
    %98 = vmatpush.msra.mxu0 %v71
    %99 = vmatpush.msra.mxu0 %v70
    %100 = vmatpush.msra.mxu0 %v69
    %101 = vmatpush.msra.mxu0 %v68
    %102 = vmatpush.msra.mxu0 %v67
    %103 = vmatmul.f32.gmra.mxu0 %v66
    %v104 = vpop.f32.mrf.mxu0
    %v105 = vadd.f32 %v85, %v104
    %106 = vdwg.mxu0
    %v107 = vmax.f32 %v105, 0.0
    %v108 = vld [vmem:[#allocation7] sm:$0xff]
    %v109 = vld [vmem:[#allocation7 + $0x8] sm:$0xff]
    %v110 = vld [vmem:[#allocation7 + $0x10] sm:$0xff]
    %v111 = vld [vmem:[#allocation7 + $0x18] sm:$0xff]
    %v112 = vld [vmem:[#allocation7 + $0x20] sm:$0xff]
    %v113 = vld [vmem:[#allocation7 + $0x28] sm:$0xff]
    %v114 = vld [vmem:[#allocation7 + $0x30] sm:$0xff]
    %v115 = vld [vmem:[#allocation7 + $0x38] sm:$0xff]
    %v116 = vld [vmem:[#allocation7 + $0x40] sm:$0xff]
    %v117 = vld [vmem:[#allocation7 + $0x48] sm:$0xff]
    %v118 = vld [vmem:[#allocation7 + $0x50] sm:$0xff]
    %v119 = vld [vmem:[#allocation7 + $0x58] sm:$0xff]
    %v120 = vld [vmem:[#allocation7 + $0x60] sm:$0xff]
    %v121 = vld [vmem:[#allocation7 + $0x68] sm:$0xff]
    %v122 = vld [vmem:[#allocation7 + $0x70] sm:$0xff]
    %v123 = vld [vmem:[#allocation7 + $0x78] sm:$0xff]
    %124 = vmatpush.msra.mxu0 %v123
    %125 = vmatpush.msra.mxu0 %v122
    %126 = vmatpush.msra.mxu0 %v121
    %127 = vmatpush.msra.mxu0 %v120
    %128 = vmatpush.msra.mxu0 %v119
    %129 = vmatpush.msra.mxu0 %v118
    %130 = vmatpush.msra.mxu0 %v117
    %131 = vmatpush.msra.mxu0 %v116
    %132 = vmatpush.msra.mxu0 %v115
    %133 = vmatpush.msra.mxu0 %v114
    %134 = vmatpush.msra.mxu0 %v113
    %135 = vmatpush.msra.mxu0 %v112
    %136 = vmatpush.msra.mxu0 %v111
    %137 = vmatpush.msra.mxu0 %v110
    %138 = vmatpush.msra.mxu0 %v109
    %139 = vmatpush.msra.mxu0 %v108
    %140 = vmatmul.f32.gmra.mxu0 %v107
    %v141 = vpop.f32.mrf.mxu0
    %v142 = vadd.f32 0.0, %v141
    %143 = vdwg.mxu0
    %v144 = vadd.f32 %v66, %v142
    %v145 = vld [vmem:[%s4] sm:$0x1]
    %v147 = vperm.slane %v145, 0
    %v149 = vadd.f32 %v144, %v147
    %150 = vst [vmem:[#allocation8] sm:$0x3] %v149
    // Predicated region
    $region34: #{tpu_custom_call.1} parent=1 // pred_check
      _
    $region35: #{tpu_custom_call.1} parent=1 // pred_check_branch
      %152 = sbr.rel (0) target = $region37
    $region36: #{tpu_custom_call.1} parent=1 // pred_region
      %154 = vsyncadd [#allocation4], 0
      %s156 = sshll.u32 [#allocation8], 4
      %s157 = int_to_ptr.vmem [resolvable:$true] %s156
      %s158 = sshll.u32 %s5, 4
      %s159 = int_to_ptr.hbm [resolvable:$true] %s158
      %161 = dma.vmem_to_hbm [thread:$0]  %s157, 32, %s159, [#allocation4]
    $region37: #{tpu_custom_call.1} parent=1 // pred_fallthru
      _
    // Predicated region
    $region38: #{tpu_custom_call.1} parent=1 // pred_check
      _
    $region39: #{tpu_custom_call.1} parent=1 // pred_check_branch
      %163 = sbr.rel (0) target = $region41
    $region40: #{tpu_custom_call.1} parent=1 // pred_region
      %165 = dma.done [#allocation4], 32
    $region41: #{tpu_custom_call.1} parent=1 // pred_fallthru
      _
    %166 = vsyncpa [#allocation3], 1
    %167 = vsyncpa [#allocation6], 1
    %168 = vsyncpa [#allocation4], 1

</llo_original>
